<compile_context>
chip_gen: v6e
topology: v6e:2x2x1
jax: 0.10.0
libtpu: 0.0.40
codegen_flags: <defaults>
</compile_context>

<pallas_src>
import functools

import jax
import jax.numpy as jnp
from jax.experimental import pallas as pl
from jax.experimental.pallas import tpu as pltpu

LEAKY_SLOPE = 0.01              # nn.LeakyReLU default
BN_EPS = 1e-5                   # nn.BatchNorm1d default
_VMEM_LIMIT = 32 * 1024 * 1024  # explicit scoped-VMEM budget (safe on v5e/v6e/v7x)
_FUSED_MAX_ROWS = 4096          # above this, stream the batch tile-by-tile


# ----------------------------------------------------------------------------
# Fully fused single-call kernel (whole batch resident in VMEM)
# ----------------------------------------------------------------------------
def _fused_kernel(x_ref,
                  w1, b1, g1, be1,
                  w2, b2, g2, be2,
                  w3, b3, g3, be3,
                  w4, b4,
                  out_ref, *, rows_valid, rows_padded):
    n = jnp.float32(rows_valid)

    def block(a_in, w, b, g, be):
        h = jnp.dot(a_in, w[...], preferred_element_type=jnp.float32) + b[...]
        a = jnp.where(h >= 0.0, h, jnp.float32(LEAKY_SLOPE) * h)
        if rows_valid != rows_padded:
            row = jax.lax.broadcasted_iota(jnp.int32, a.shape, 0)
            a_m = jnp.where(row < rows_valid, a, 0.0)
        else:
            a_m = a
        mean = jnp.sum(a_m, axis=0, keepdims=True) / n
        var = jnp.maximum(jnp.sum(a_m * a_m, axis=0, keepdims=True) / n
                          - mean * mean, 0.0)
        inv = jax.lax.rsqrt(var + BN_EPS)
        return (a - mean) * (inv * g[...]) + be[...]

    a1 = block(x_ref[...], w1, b1, g1, be1)
    a2 = block(a1, w2, b2, g2, be2)
    a3 = block(a2, w3, b3, g3, be3)

    # Lane-dense head: (1,30) x (rows,30)^T -> (1, rows).
    z = jax.lax.dot_general(
        w4[...], a3,
        dimension_numbers=(((1,), (1,)), ((), ())),
        preferred_element_type=jnp.float32) + b4[...]
    out_ref[...] = 1.0 / (1.0 + jnp.exp(-z))


def _fused_forward(x, p, *, rows_valid, rows_padded):
    kernel = functools.partial(_fused_kernel, rows_valid=rows_valid,
                               rows_padded=rows_padded)
    out = pl.pallas_call(
        kernel,
        out_shape=jax.ShapeDtypeStruct((1, rows_padded), jnp.float32),
        compiler_params=pltpu.CompilerParams(vmem_limit_bytes=_VMEM_LIMIT),
    )(x,
      p["w1"], p["b1"], p["g1"][None, :], p["be1"][None, :],
      p["w2"], p["b2"], p["g2"][None, :], p["be2"][None, :],
      p["w3"], p["b3"], p["g3"][None, :], p["be3"][None, :],
      p["w4"].T, p["b4"])
    return out.reshape(rows_padded, 1)


# ----------------------------------------------------------------------------
# Tiled-path kernels (batch streamed tile-by-tile)
# ----------------------------------------------------------------------------
def _block_kernel(x_ref, w_ref, b_ref, a_ref, sum_ref, sq_ref,
                  *, rows_valid, rows_padded, block_rows):
    """Linear -> LeakyReLU for one batch tile; accumulate per-feature sum and
    sum-of-squares across tiles (training-mode BatchNorm statistics)."""
    i = pl.program_id(0)

    h = jnp.dot(x_ref[...], w_ref[...],
                preferred_element_type=jnp.float32) + b_ref[...]
    a = jnp.where(h >= 0.0, h, jnp.float32(LEAKY_SLOPE) * h)
    a_ref[...] = a

    # Exclude batch-padding rows from the statistics (only needed if padded).
    if rows_valid != rows_padded:
        row = i * block_rows + jax.lax.broadcasted_iota(jnp.int32, a.shape, 0)
        a = jnp.where(row < rows_valid, a, 0.0)

    @pl.when(i == 0)
    def _():
        sum_ref[...] = jnp.zeros_like(sum_ref)
        sq_ref[...] = jnp.zeros_like(sq_ref)

    sum_ref[...] += jnp.sum(a, axis=0, keepdims=True)
    sq_ref[...] += jnp.sum(a * a, axis=0, keepdims=True)


def _head_kernel(x_ref, w_ref, b_ref, out_ref):
    """(BN-folded) Linear(30->1) + Sigmoid, stored lane-dense: one row of TILE
    sigmoid values per grid step instead of a (TILE, 1) masked column."""
    z = jax.lax.dot_general(
        w_ref[...], x_ref[...],
        dimension_numbers=(((1,), (1,)), ((), ())),
        preferred_element_type=jnp.float32)
    zb = z + b_ref[...]
    out_ref[0] = 1.0 / (1.0 + jnp.exp(-zb))


def _linear_leaky_stats(x, w, b, *, rows_valid, block_rows):
    rows_padded, f_in = x.shape
    f_out = w.shape[1]
    num_tiles = rows_padded // block_rows
    kernel = functools.partial(_block_kernel, rows_valid=rows_valid,
                               rows_padded=rows_padded, block_rows=block_rows)
    return pl.pallas_call(
        kernel,
        grid=(num_tiles,),
        in_specs=[
            pl.BlockSpec((block_rows, f_in), lambda i: (i, 0)),   # activations
            pl.BlockSpec((f_in, f_out), lambda i: (0, 0)),        # weight (resident)
            pl.BlockSpec((1, f_out), lambda i: (0, 0)),           # bias (resident)
        ],
        out_specs=[
            pl.BlockSpec((block_rows, f_out), lambda i: (i, 0)),  # pre-BN activation
            pl.BlockSpec((1, f_out), lambda i: (0, 0)),           # sum accumulator
            pl.BlockSpec((1, f_out), lambda i: (0, 0)),           # sumsq accumulator
        ],
        out_shape=[
            jax.ShapeDtypeStruct((rows_padded, f_out), jnp.float32),
            jax.ShapeDtypeStruct((1, f_out), jnp.float32),
            jax.ShapeDtypeStruct((1, f_out), jnp.float32),
        ],
        compiler_params=pltpu.CompilerParams(
            dimension_semantics=("arbitrary",),   # carries resident accumulators
            vmem_limit_bytes=_VMEM_LIMIT),
    )(x, w, b)


def _head(x, w_row, b, *, block_rows):
    rows_padded, f_in = x.shape
    num_tiles = rows_padded // block_rows
    return pl.pallas_call(
        _head_kernel,
        grid=(num_tiles,),
        in_specs=[
            pl.BlockSpec((block_rows, f_in), lambda i: (i, 0)),
            pl.BlockSpec((1, f_in), lambda i: (0, 0)),
            pl.BlockSpec((1, 1), lambda i: (0, 0)),
        ],
        out_specs=pl.BlockSpec((1, 1, block_rows), lambda i: (i, 0, 0)),
        out_shape=jax.ShapeDtypeStruct((num_tiles, 1, block_rows), jnp.float32),
        compiler_params=pltpu.CompilerParams(
            dimension_semantics=("parallel",),    # independent tiles: v7x 2 TCs
            vmem_limit_bytes=_VMEM_LIMIT),
    )(x, w_row, b)


def _fold_bn_into_linear(s, ss, gamma, beta, w_next, b_next, n_rows):
    """Fold training-mode BatchNorm1d (batch mean, biased batch var, affine) of
    the previous layer into the next Linear's weight / bias (tiny wrapper op)."""
    mean = s[0] / n_rows
    var = jnp.maximum(ss[0] / n_rows - mean * mean, 0.0)
    scale = gamma * jax.lax.rsqrt(var + BN_EPS)      # (F,)
    shift = beta - mean * scale                      # (F,)
    w_f = w_next * scale[:, None]
    b_f = b_next + (shift @ w_next)[None, :]
    return w_f, b_f


def _tiled_forward(x, params, *, rows_valid, block_rows):
    a1, s1, q1 = _linear_leaky_stats(x, params["w1"], params["b1"],
                                     rows_valid=rows_valid, block_rows=block_rows)
    w2, b2 = _fold_bn_into_linear(s1, q1, params["g1"], params["be1"],
                                  params["w2"], params["b2"], rows_valid)
    a2, s2, q2 = _linear_leaky_stats(a1, w2, b2,
                                     rows_valid=rows_valid, block_rows=block_rows)
    w3, b3 = _fold_bn_into_linear(s2, q2, params["g2"], params["be2"],
                                  params["w3"], params["b3"], rows_valid)
    a3, s3, q3 = _linear_leaky_stats(a2, w3, b3,
                                     rows_valid=rows_valid, block_rows=block_rows)
    w4, b4 = _fold_bn_into_linear(s3, q3, params["g3"], params["be3"],
                                  params["w4"], params["b4"], rows_valid)

    out_tiles = _head(a3, w4.T, b4, block_rows=block_rows)   # (nt, 1, TILE)
    return out_tiles.reshape(x.shape[0], 1)


# ----------------------------------------------------------------------------
# Public forward
# ----------------------------------------------------------------------------
def classifier_binary_forward(x, params, block_rows=None):
    """x: (B, inputSize) float32. Returns (B, 1) sigmoid probabilities with the
    module's default (training-mode) BatchNorm semantics."""
    batch = x.shape[0]

    if block_rows is None:
        rows_padded = max(8, -(-batch // 8) * 8)
        if rows_padded <= _FUSED_MAX_ROWS:
            # Whole network in one VMEM-resident kernel.
            if rows_padded != batch:
                x = jnp.pad(x, ((0, rows_padded - batch), (0, 0)))
            out = _fused_forward(x, params, rows_valid=batch,
                                 rows_padded=rows_padded)
            return out[:batch]
        block_rows = 512   # large batches: stream as 512-row tiles

    rows_padded = -(-batch // block_rows) * block_rows
    if rows_padded != batch:
        x = jnp.pad(x, ((0, rows_padded - batch), (0, 0)))
    out = _tiled_forward(x, params, rows_valid=batch, block_rows=block_rows)
    return out[:batch]


# ----------------------------------------------------------------------------
# Params / reference / test
# ----------------------------------------------------------------------------
def init_params(key, input_size):
    """kaiming_uniform_ weights, uniform(-0.5, 0.5) biases, BN gamma=1/beta=0.
    Weights stored (in, out) == transpose of PyTorch's (out, in)."""
    sizes = [(input_size, 80), (80, 50), (50, 30), (30, 1)]
    params = {}
    for i, (fan_in, fan_out) in enumerate(sizes, start=1):
        key, kw, kb = jax.random.split(key, 3)
        bound = float(jnp.sqrt(6.0 / fan_in))   # kaiming_uniform_ (a=0, fan_in)
        params[f"w{i}"] = jax.random.uniform(kw, (fan_in, fan_out), jnp.float32,
                                             -bound, bound)
        params[f"b{i}"] = jax.random.uniform(kb, (1, fan_out), jnp.float32,
                                             -0.5, 0.5)
    for i, f in enumerate([80, 50, 30], start=1):
        params[f"g{i}"] = jnp.ones((f,), jnp.float32)
        params[f"be{i}"] = jnp.zeros((f,), jnp.float32)
    return params


def _reference_forward(x, p):
    def bn(v, g, b):
        m = jnp.mean(v, axis=0, keepdims=True)
        va = jnp.mean((v - m) ** 2, axis=0, keepdims=True)
        return (v - m) / jnp.sqrt(va + BN_EPS) * g + b
    lrelu = lambda v: jnp.where(v >= 0, v, LEAKY_SLOPE * v)
    h = bn(lrelu(x @ p["w1"] + p["b1"]), p["g1"], p["be1"])
    h = bn(lrelu(h @ p["w2"] + p["b2"]), p["g2"], p["be2"])
    h = bn(lrelu(h @ p["w3"] + p["b3"]), p["g3"], p["be3"])
    return jax.nn.sigmoid(h @ p["w4"] + p["b4"])


if __name__ == "__main__":
    key = jax.random.PRNGKey(0)
    key, kx, kx2 = jax.random.split(key, 3)

    INPUT_SIZE = 32
    BATCH = 8

    params = init_params(key, INPUT_SIZE)
    fwd = jax.jit(classifier_binary_forward, static_argnames=("block_rows",))

    # Small batch: fully fused single-kernel path.
    x = jax.random.normal(kx, (BATCH, INPUT_SIZE), jnp.float32)
    out = jax.block_until_ready(fwd(x, params))
    assert out.shape == (BATCH, 1)
    assert bool(jnp.all((out >= 0.0) & (out <= 1.0)))
    assert bool(jnp.allclose(out, _reference_forward(x, params),
                             atol=1e-4, rtol=1e-4))

    # Non-aligned batch, fused path: exercises row-masked in-kernel BN stats.
    x2 = jax.random.normal(kx2, (300, INPUT_SIZE), jnp.float32)
    out2 = jax.block_until_ready(fwd(x2, params))
    assert out2.shape == (300, 1)
    assert bool(jnp.allclose(out2, _reference_forward(x2, params),
                             atol=1e-4, rtol=1e-4))

    # Same batch, forced tiled path: multi-tile grid, cross-tile BN-stat
    # accumulation with row masking, lane-dense head output.
    out3 = jax.block_until_ready(fwd(x2, params, block_rows=128))
    assert out3.shape == (300, 1)
    assert bool(jnp.all((out3 >= 0.0) & (out3 <= 1.0)))
    assert bool(jnp.allclose(out3, _reference_forward(x2, params),
                             atol=1e-4, rtol=1e-4))

    print("KERNEL_OK")
</pallas_src>

<mosaic_0001>
module attributes {stable_mosaic.version = 11 : i64} {
  func.func @_fused_kernel(%arg0: memref<8x32xf32, #tpu.memory_space<vmem>>, %arg1: memref<32x80xf32, #tpu.memory_space<vmem>>, %arg2: memref<1x80xf32, #tpu.memory_space<vmem>>, %arg3: memref<1x80xf32, #tpu.memory_space<vmem>>, %arg4: memref<1x80xf32, #tpu.memory_space<vmem>>, %arg5: memref<80x50xf32, #tpu.memory_space<vmem>>, %arg6: memref<1x50xf32, #tpu.memory_space<vmem>>, %arg7: memref<1x50xf32, #tpu.memory_space<vmem>>, %arg8: memref<1x50xf32, #tpu.memory_space<vmem>>, %arg9: memref<50x30xf32, #tpu.memory_space<vmem>>, %arg10: memref<1x30xf32, #tpu.memory_space<vmem>>, %arg11: memref<1x30xf32, #tpu.memory_space<vmem>>, %arg12: memref<1x30xf32, #tpu.memory_space<vmem>>, %arg13: memref<1x30xf32, #tpu.memory_space<vmem>>, %arg14: memref<1x1xf32, #tpu.memory_space<vmem>>, %arg15: memref<1x8xf32, #tpu.memory_space<vmem>>) attributes {dimension_semantics = [], scalar_prefetch = 0 : i64, scratch_operands = 0 : i64, tpu.core_type = #tpu.core_type<tc>} {
    %c0 = arith.constant 0 : index
    %c0_0 = arith.constant 0 : index
    %0 = vector.load %arg0[%c0, %c0_0] : memref<8x32xf32, #tpu.memory_space<vmem>>, vector<8x32xf32>
    %c0_1 = arith.constant 0 : index
    %c0_2 = arith.constant 0 : index
    %1 = vector.load %arg1[%c0_1, %c0_2] : memref<32x80xf32, #tpu.memory_space<vmem>>, vector<32x80xf32>
    %cst = arith.constant dense<0.000000e+00> : vector<8x80xf32>
    %2 = tpu.matmul %0, %1, %cst {dimension_numbers = #tpu.dot_dimension_numbers<[1], [0], [0], [1], [0, 0, 1, 1], [], []>} : vector<8x32xf32>, vector<32x80xf32>, vector<8x80xf32> -> vector<8x80xf32>
    %c0_3 = arith.constant 0 : index
    %c0_4 = arith.constant 0 : index
    %3 = vector.load %arg2[%c0_3, %c0_4] : memref<1x80xf32, #tpu.memory_space<vmem>>, vector<1x80xf32>
    %4 = vector.broadcast %3 : vector<1x80xf32> to vector<8x80xf32>
    %5 = arith.addf %2, %4 : vector<8x80xf32>
    %cst_5 = arith.constant 0.000000e+00 : f32
    %6 = vector.broadcast %cst_5 : f32 to vector<8x80xf32>
    %7 = arith.cmpf oge, %5, %6 : vector<8x80xf32>
    %cst_6 = arith.constant 0.00999999977 : f32
    %8 = vector.broadcast %cst_6 : f32 to vector<8x80xf32>
    %9 = arith.mulf %8, %5 : vector<8x80xf32>
    %10 = arith.select %7, %5, %9 : vector<8x80xi1>, vector<8x80xf32>
    %cst_7 = arith.constant dense<0.000000e+00> : vector<80xf32>
    %11 = vector.multi_reduction <add>, %10, %cst_7 [0] : vector<8x80xf32> to vector<80xf32>
    %12 = vector.shape_cast %11 : vector<80xf32> to vector<1x80xf32>
    %cst_8 = arith.constant 8.000000e+00 : f32
    %13 = vector.broadcast %cst_8 : f32 to vector<1x80xf32>
    %14 = arith.divf %12, %13 : vector<1x80xf32>
    %15 = arith.mulf %10, %10 : vector<8x80xf32>
    %cst_9 = arith.constant dense<0.000000e+00> : vector<80xf32>
    %16 = vector.multi_reduction <add>, %15, %cst_9 [0] : vector<8x80xf32> to vector<80xf32>
    %17 = vector.shape_cast %16 : vector<80xf32> to vector<1x80xf32>
    %cst_10 = arith.constant 8.000000e+00 : f32
    %18 = vector.broadcast %cst_10 : f32 to vector<1x80xf32>
    %19 = arith.divf %17, %18 : vector<1x80xf32>
    %20 = arith.mulf %14, %14 : vector<1x80xf32>
    %21 = arith.subf %19, %20 : vector<1x80xf32>
    %cst_11 = arith.constant 0.000000e+00 : f32
    %22 = vector.broadcast %cst_11 : f32 to vector<1x80xf32>
    %23 = arith.maximumf %21, %22 : vector<1x80xf32>
    %cst_12 = arith.constant 9.99999974E-6 : f32
    %24 = vector.broadcast %cst_12 : f32 to vector<1x80xf32>
    %25 = arith.addf %23, %24 : vector<1x80xf32>
    %26 = math.rsqrt %25 : vector<1x80xf32>
    %27 = vector.broadcast %14 : vector<1x80xf32> to vector<8x80xf32>
    %28 = arith.subf %10, %27 : vector<8x80xf32>
    %c0_13 = arith.constant 0 : index
    %c0_14 = arith.constant 0 : index
    %29 = vector.load %arg3[%c0_13, %c0_14] : memref<1x80xf32, #tpu.memory_space<vmem>>, vector<1x80xf32>
    %30 = arith.mulf %26, %29 : vector<1x80xf32>
    %31 = vector.broadcast %30 : vector<1x80xf32> to vector<8x80xf32>
    %32 = arith.mulf %28, %31 : vector<8x80xf32>
    %c0_15 = arith.constant 0 : index
    %c0_16 = arith.constant 0 : index
    %33 = vector.load %arg4[%c0_15, %c0_16] : memref<1x80xf32, #tpu.memory_space<vmem>>, vector<1x80xf32>
    %34 = vector.broadcast %33 : vector<1x80xf32> to vector<8x80xf32>
    %35 = arith.addf %32, %34 : vector<8x80xf32>
    %c0_17 = arith.constant 0 : index
    %c0_18 = arith.constant 0 : index
    %36 = vector.load %arg5[%c0_17, %c0_18] : memref<80x50xf32, #tpu.memory_space<vmem>>, vector<80x50xf32>
    %cst_19 = arith.constant dense<0.000000e+00> : vector<8x50xf32>
    %37 = tpu.matmul %35, %36, %cst_19 {dimension_numbers = #tpu.dot_dimension_numbers<[1], [0], [0], [1], [0, 0, 1, 1], [], []>} : vector<8x80xf32>, vector<80x50xf32>, vector<8x50xf32> -> vector<8x50xf32>
    %c0_20 = arith.constant 0 : index
    %c0_21 = arith.constant 0 : index
    %38 = vector.load %arg6[%c0_20, %c0_21] : memref<1x50xf32, #tpu.memory_space<vmem>>, vector<1x50xf32>
    %39 = vector.broadcast %38 : vector<1x50xf32> to vector<8x50xf32>
    %40 = arith.addf %37, %39 : vector<8x50xf32>
    %cst_22 = arith.constant 0.000000e+00 : f32
    %41 = vector.broadcast %cst_22 : f32 to vector<8x50xf32>
    %42 = arith.cmpf oge, %40, %41 : vector<8x50xf32>
    %cst_23 = arith.constant 0.00999999977 : f32
    %43 = vector.broadcast %cst_23 : f32 to vector<8x50xf32>
    %44 = arith.mulf %43, %40 : vector<8x50xf32>
    %45 = arith.select %42, %40, %44 : vector<8x50xi1>, vector<8x50xf32>
    %cst_24 = arith.constant dense<0.000000e+00> : vector<50xf32>
    %46 = vector.multi_reduction <add>, %45, %cst_24 [0] : vector<8x50xf32> to vector<50xf32>
    %47 = vector.shape_cast %46 : vector<50xf32> to vector<1x50xf32>
    %cst_25 = arith.constant 8.000000e+00 : f32
    %48 = vector.broadcast %cst_25 : f32 to vector<1x50xf32>
    %49 = arith.divf %47, %48 : vector<1x50xf32>
    %50 = arith.mulf %45, %45 : vector<8x50xf32>
    %cst_26 = arith.constant dense<0.000000e+00> : vector<50xf32>
    %51 = vector.multi_reduction <add>, %50, %cst_26 [0] : vector<8x50xf32> to vector<50xf32>
    %52 = vector.shape_cast %51 : vector<50xf32> to vector<1x50xf32>
    %cst_27 = arith.constant 8.000000e+00 : f32
    %53 = vector.broadcast %cst_27 : f32 to vector<1x50xf32>
    %54 = arith.divf %52, %53 : vector<1x50xf32>
    %55 = arith.mulf %49, %49 : vector<1x50xf32>
    %56 = arith.subf %54, %55 : vector<1x50xf32>
    %cst_28 = arith.constant 0.000000e+00 : f32
    %57 = vector.broadcast %cst_28 : f32 to vector<1x50xf32>
    %58 = arith.maximumf %56, %57 : vector<1x50xf32>
    %cst_29 = arith.constant 9.99999974E-6 : f32
    %59 = vector.broadcast %cst_29 : f32 to vector<1x50xf32>
    %60 = arith.addf %58, %59 : vector<1x50xf32>
    %61 = math.rsqrt %60 : vector<1x50xf32>
    %62 = vector.broadcast %49 : vector<1x50xf32> to vector<8x50xf32>
    %63 = arith.subf %45, %62 : vector<8x50xf32>
    %c0_30 = arith.constant 0 : index
    %c0_31 = arith.constant 0 : index
    %64 = vector.load %arg7[%c0_30, %c0_31] : memref<1x50xf32, #tpu.memory_space<vmem>>, vector<1x50xf32>
    %65 = arith.mulf %61, %64 : vector<1x50xf32>
    %66 = vector.broadcast %65 : vector<1x50xf32> to vector<8x50xf32>
    %67 = arith.mulf %63, %66 : vector<8x50xf32>
    %c0_32 = arith.constant 0 : index
    %c0_33 = arith.constant 0 : index
    %68 = vector.load %arg8[%c0_32, %c0_33] : memref<1x50xf32, #tpu.memory_space<vmem>>, vector<1x50xf32>
    %69 = vector.broadcast %68 : vector<1x50xf32> to vector<8x50xf32>
    %70 = arith.addf %67, %69 : vector<8x50xf32>
    %c0_34 = arith.constant 0 : index
    %c0_35 = arith.constant 0 : index
    %71 = vector.load %arg9[%c0_34, %c0_35] : memref<50x30xf32, #tpu.memory_space<vmem>>, vector<50x30xf32>
    %cst_36 = arith.constant dense<0.000000e+00> : vector<8x30xf32>
    %72 = tpu.matmul %70, %71, %cst_36 {dimension_numbers = #tpu.dot_dimension_numbers<[1], [0], [0], [1], [0, 0, 1, 1], [], []>} : vector<8x50xf32>, vector<50x30xf32>, vector<8x30xf32> -> vector<8x30xf32>
    %c0_37 = arith.constant 0 : index
    %c0_38 = arith.constant 0 : index
    %73 = vector.load %arg10[%c0_37, %c0_38] : memref<1x30xf32, #tpu.memory_space<vmem>>, vector<1x30xf32>
    %74 = vector.broadcast %73 : vector<1x30xf32> to vector<8x30xf32>
    %75 = arith.addf %72, %74 : vector<8x30xf32>
    %cst_39 = arith.constant 0.000000e+00 : f32
    %76 = vector.broadcast %cst_39 : f32 to vector<8x30xf32>
    %77 = arith.cmpf oge, %75, %76 : vector<8x30xf32>
    %cst_40 = arith.constant 0.00999999977 : f32
    %78 = vector.broadcast %cst_40 : f32 to vector<8x30xf32>
    %79 = arith.mulf %78, %75 : vector<8x30xf32>
    %80 = arith.select %77, %75, %79 : vector<8x30xi1>, vector<8x30xf32>
    %cst_41 = arith.constant dense<0.000000e+00> : vector<30xf32>
    %81 = vector.multi_reduction <add>, %80, %cst_41 [0] : vector<8x30xf32> to vector<30xf32>
    %82 = vector.shape_cast %81 : vector<30xf32> to vector<1x30xf32>
    %cst_42 = arith.constant 8.000000e+00 : f32
    %83 = vector.broadcast %cst_42 : f32 to vector<1x30xf32>
    %84 = arith.divf %82, %83 : vector<1x30xf32>
    %85 = arith.mulf %80, %80 : vector<8x30xf32>
    %cst_43 = arith.constant dense<0.000000e+00> : vector<30xf32>
    %86 = vector.multi_reduction <add>, %85, %cst_43 [0] : vector<8x30xf32> to vector<30xf32>
    %87 = vector.shape_cast %86 : vector<30xf32> to vector<1x30xf32>
    %cst_44 = arith.constant 8.000000e+00 : f32
    %88 = vector.broadcast %cst_44 : f32 to vector<1x30xf32>
    %89 = arith.divf %87, %88 : vector<1x30xf32>
    %90 = arith.mulf %84, %84 : vector<1x30xf32>
    %91 = arith.subf %89, %90 : vector<1x30xf32>
    %cst_45 = arith.constant 0.000000e+00 : f32
    %92 = vector.broadcast %cst_45 : f32 to vector<1x30xf32>
    %93 = arith.maximumf %91, %92 : vector<1x30xf32>
    %cst_46 = arith.constant 9.99999974E-6 : f32
    %94 = vector.broadcast %cst_46 : f32 to vector<1x30xf32>
    %95 = arith.addf %93, %94 : vector<1x30xf32>
    %96 = math.rsqrt %95 : vector<1x30xf32>
    %97 = vector.broadcast %84 : vector<1x30xf32> to vector<8x30xf32>
    %98 = arith.subf %80, %97 : vector<8x30xf32>
    %c0_47 = arith.constant 0 : index
    %c0_48 = arith.constant 0 : index
    %99 = vector.load %arg11[%c0_47, %c0_48] : memref<1x30xf32, #tpu.memory_space<vmem>>, vector<1x30xf32>
    %100 = arith.mulf %96, %99 : vector<1x30xf32>
    %101 = vector.broadcast %100 : vector<1x30xf32> to vector<8x30xf32>
    %102 = arith.mulf %98, %101 : vector<8x30xf32>
    %c0_49 = arith.constant 0 : index
    %c0_50 = arith.constant 0 : index
    %103 = vector.load %arg12[%c0_49, %c0_50] : memref<1x30xf32, #tpu.memory_space<vmem>>, vector<1x30xf32>
    %104 = vector.broadcast %103 : vector<1x30xf32> to vector<8x30xf32>
    %105 = arith.addf %102, %104 : vector<8x30xf32>
    %c0_51 = arith.constant 0 : index
    %c0_52 = arith.constant 0 : index
    %106 = vector.load %arg13[%c0_51, %c0_52] : memref<1x30xf32, #tpu.memory_space<vmem>>, vector<1x30xf32>
    %cst_53 = arith.constant dense<0.000000e+00> : vector<1x8xf32>
    %107 = tpu.matmul %106, %105, %cst_53 {dimension_numbers = #tpu.dot_dimension_numbers<[1], [1], [0], [0], [0, 0, 1, 0], [], []>} : vector<1x30xf32>, vector<8x30xf32>, vector<1x8xf32> -> vector<1x8xf32>
    %c0_54 = arith.constant 0 : index
    %c0_55 = arith.constant 0 : index
    %108 = vector.load %arg14[%c0_54, %c0_55] : memref<1x1xf32, #tpu.memory_space<vmem>>, vector<1x1xf32>
    %109 = vector.broadcast %108 : vector<1x1xf32> to vector<1x8xf32>
    %110 = arith.addf %107, %109 : vector<1x8xf32>
    %cst_56 = arith.constant 0.000000e+00 : f32
    %111 = vector.broadcast %cst_56 : f32 to vector<1x8xf32>
    %112 = arith.subf %111, %110 : vector<1x8xf32>
    %113 = math.exp %112 : vector<1x8xf32>
    %cst_57 = arith.constant 1.000000e+00 : f32
    %114 = vector.broadcast %cst_57 : f32 to vector<1x8xf32>
    %115 = arith.addf %114, %113 : vector<1x8xf32>
    %cst_58 = arith.constant 1.000000e+00 : f32
    %116 = vector.broadcast %cst_58 : f32 to vector<1x8xf32>
    %117 = arith.divf %116, %115 : vector<1x8xf32>
    %c0_59 = arith.constant 0 : index
    %c0_60 = arith.constant 0 : index
    %118 = vector.load %arg15[%c0_59, %c0_60] : memref<1x8xf32, #tpu.memory_space<vmem>>, vector<1x8xf32>
    tpu.vector_store %arg15[%c0_59, %c0_60], %117 {strides = array<i32>} : memref<1x8xf32, #tpu.memory_space<vmem>>, vector<1x8xf32>,
    return
  }
}

</mosaic_0001>

<llo_original>
// kernel: classifier_binary_forward.1
$region0: #{classifier_binary_forward.1}
  #allocation0 [shape = 'u32[]', space=smem, size = 0x4, offset = 0x4, fixed_abs, tag = 'smem constant byte address 0x4 - core index']
  #allocation1 [shape = 'u32[144,128]{1,0:T(1,128)}', space=vmem, size = 0x12000, scoped, tag = 'internal scratch']
  #allocation2 [shape = 'f32[1,1]{1,0:T(1,128)S(1)}', space=vmem, size = 0x200, scoped, tag = 'scoped memory for classifier_binary_forward.1']
  %s0 = inlined_call_operand.vmem [shape: f32[8,32], index: 0, kind: input, shape index: {}]
  %s1 = inlined_call_operand.vmem [shape: f32[32,80], index: 1, kind: input, shape index: {}]
  %s2 = inlined_call_operand.vmem [shape: f32[1,80], index: 2, kind: input, shape index: {}]
  %s3 = inlined_call_operand.vmem [shape: f32[1,80], index: 3, kind: input, shape index: {}]
  %s4 = inlined_call_operand.vmem [shape: f32[1,80], index: 4, kind: input, shape index: {}]
  %s5 = inlined_call_operand.vmem [shape: f32[80,50], index: 5, kind: input, shape index: {}]
  %s6 = inlined_call_operand.vmem [shape: f32[1,50], index: 6, kind: input, shape index: {}]
  %s7 = inlined_call_operand.vmem [shape: f32[1,50], index: 7, kind: input, shape index: {}]
  %s8 = inlined_call_operand.vmem [shape: f32[1,50], index: 8, kind: input, shape index: {}]
  %s9 = inlined_call_operand.vmem [shape: f32[50,30], index: 9, kind: input, shape index: {}]
  %s10 = inlined_call_operand.vmem [shape: f32[1,30], index: 10, kind: input, shape index: {}]
  %s11 = inlined_call_operand.vmem [shape: f32[1,30], index: 11, kind: input, shape index: {}]
  %s12 = inlined_call_operand.vmem [shape: f32[1,30], index: 12, kind: input, shape index: {}]
  %s13 = inlined_call_operand.vmem [shape: f32[1,30], index: 13, kind: input, shape index: {}]
  %s14 = inlined_call_operand.<no memory space> [shape: f32[1,1], index: 14, kind: input, shape index: {}]
  %s15 = inlined_call_operand.hbm [shape: f32[1,8], index: 15, kind: output, shape index: {}]
  %s16 = sld [smem:[#allocation0]]
  $region70: #{classifier_binary_forward.1} parent=0
    _
  %s18 = ssub.s32 1, %s16
  %s19 = scalar_select 0, %s18, %s16
  %v20 = vstv %s14
  %21 = vst [vmem:[#allocation2] sm:$0x1] %v20
  $region1: #{classifier_binary_forward.1} parent=0
    #allocation3 [shape = 'u8[512]{0}', space=vmem, size = 0x400, scoped, tag = 'output window, operand 0, single buffered']
    #allocation4 [shape = 's32[1]{0}', space=sflag, size = 0x4, scoped, tag = 'scoped memory for classifier_binary_forward.1']
    %22 = vsyncpa [#allocation4], 0
    // Predicated region
    $region2: #{classifier_binary_forward.1} parent=1 // pred_check
      _
    $region3: #{classifier_binary_forward.1} parent=1 // pred_check_branch
      %24 = sbr.rel (0) target = $region5
    $region4: #{classifier_binary_forward.1} parent=1 // pred_region
      _
    $region5: #{classifier_binary_forward.1} parent=1 // pred_fallthru
      _
    // Predicated region
    $region6: #{classifier_binary_forward.1} parent=1 // pred_check
      _
    $region7: #{classifier_binary_forward.1} parent=1 // pred_check_branch
      %26 = sbr.rel (0) target = $region9
    $region8: #{classifier_binary_forward.1} parent=1 // pred_region
      _
    $region9: #{classifier_binary_forward.1} parent=1 // pred_fallthru
      _
    // Predicated region
    $region10: #{classifier_binary_forward.1} parent=1 // pred_check
      _
    $region11: #{classifier_binary_forward.1} parent=1 // pred_check_branch
      %28 = sbr.rel (0) target = $region13
    $region12: #{classifier_binary_forward.1} parent=1 // pred_region
      _
    $region13: #{classifier_binary_forward.1} parent=1 // pred_fallthru
      _
    // Predicated region
    $region14: #{classifier_binary_forward.1} parent=1 // pred_check
      _
    $region15: #{classifier_binary_forward.1} parent=1 // pred_check_branch
      %30 = sbr.rel (0) target = $region17
    $region16: #{classifier_binary_forward.1} parent=1 // pred_region
      _
    $region17: #{classifier_binary_forward.1} parent=1 // pred_fallthru
      _
    // Predicated region
    $region18: #{classifier_binary_forward.1} parent=1 // pred_check
      _
    $region19: #{classifier_binary_forward.1} parent=1 // pred_check_branch
      %32 = sbr.rel (0) target = $region21
    $region20: #{classifier_binary_forward.1} parent=1 // pred_region
      _
    $region21: #{classifier_binary_forward.1} parent=1 // pred_fallthru
      _
    // Predicated region
    $region22: #{classifier_binary_forward.1} parent=1 // pred_check
      _
    $region23: #{classifier_binary_forward.1} parent=1 // pred_check_branch
      %34 = sbr.rel (0) target = $region25
    $region24: #{classifier_binary_forward.1} parent=1 // pred_region
      _
    $region25: #{classifier_binary_forward.1} parent=1 // pred_fallthru
      _
    // Predicated region
    $region26: #{classifier_binary_forward.1} parent=1 // pred_check
      _
    $region27: #{classifier_binary_forward.1} parent=1 // pred_check_branch
      %36 = sbr.rel (0) target = $region29
    $region28: #{classifier_binary_forward.1} parent=1 // pred_region
      _
    $region29: #{classifier_binary_forward.1} parent=1 // pred_fallthru
      _
    // Predicated region
    $region30: #{classifier_binary_forward.1} parent=1 // pred_check
      _
    $region31: #{classifier_binary_forward.1} parent=1 // pred_check_branch
      %38 = sbr.rel (0) target = $region33
    $region32: #{classifier_binary_forward.1} parent=1 // pred_region
      _
    $region33: #{classifier_binary_forward.1} parent=1 // pred_fallthru
      _
    // Predicated region
    $region34: #{classifier_binary_forward.1} parent=1 // pred_check
      _
    $region35: #{classifier_binary_forward.1} parent=1 // pred_check_branch
      %40 = sbr.rel (0) target = $region37
    $region36: #{classifier_binary_forward.1} parent=1 // pred_region
      _
    $region37: #{classifier_binary_forward.1} parent=1 // pred_fallthru
      _
    // Predicated region
    $region38: #{classifier_binary_forward.1} parent=1 // pred_check
      _
    $region39: #{classifier_binary_forward.1} parent=1 // pred_check_branch
      %42 = sbr.rel (0) target = $region41
    $region40: #{classifier_binary_forward.1} parent=1 // pred_region
      _
    $region41: #{classifier_binary_forward.1} parent=1 // pred_fallthru
      _
    // Predicated region
    $region42: #{classifier_binary_forward.1} parent=1 // pred_check
      _
    $region43: #{classifier_binary_forward.1} parent=1 // pred_check_branch
      %44 = sbr.rel (0) target = $region45
    $region44: #{classifier_binary_forward.1} parent=1 // pred_region
      _
    $region45: #{classifier_binary_forward.1} parent=1 // pred_fallthru
      _
    // Predicated region
    $region46: #{classifier_binary_forward.1} parent=1 // pred_check
      _
    $region47: #{classifier_binary_forward.1} parent=1 // pred_check_branch
      %46 = sbr.rel (0) target = $region49
    $region48: #{classifier_binary_forward.1} parent=1 // pred_region
      _
    $region49: #{classifier_binary_forward.1} parent=1 // pred_fallthru
      _
    // Predicated region
    $region50: #{classifier_binary_forward.1} parent=1 // pred_check
      _
    $region51: #{classifier_binary_forward.1} parent=1 // pred_check_branch
      %48 = sbr.rel (0) target = $region53
    $region52: #{classifier_binary_forward.1} parent=1 // pred_region
      _
    $region53: #{classifier_binary_forward.1} parent=1 // pred_fallthru
      _
    // Predicated region
    $region54: #{classifier_binary_forward.1} parent=1 // pred_check
      _
    $region55: #{classifier_binary_forward.1} parent=1 // pred_check_branch
      %50 = sbr.rel (0) target = $region57
    $region56: #{classifier_binary_forward.1} parent=1 // pred_region
      _
    $region57: #{classifier_binary_forward.1} parent=1 // pred_fallthru
      _
    // Predicated region
    $region58: #{classifier_binary_forward.1} parent=1 // pred_check
      _
    $region59: #{classifier_binary_forward.1} parent=1 // pred_check_branch
      %52 = sbr.rel (0) target = $region61
    $region60: #{classifier_binary_forward.1} parent=1 // pred_region
      _
    $region61: #{classifier_binary_forward.1} parent=1 // pred_fallthru
      _
    %v53 = vld [vmem:[%s0] sm:$0xff]
    %v54 = vld [vmem:[%s1] sm:$0xff]
    %v55 = vld [vmem:[%s1 + $0x8] sm:$0xff]
    %v56 = vld [vmem:[%s1 + $0x10] sm:$0xff]
    %v57 = vld [vmem:[%s1 + $0x18] sm:$0xff]
    %v58 = vld [vmem:[%s2] sm:$0x1]
    %v60 = vlaneseq
    %v61 = vshrl.u32 %v60, 7
    %v62 = vsub.s32 0, %v61
    %v63 = vrot.slane %v58, %v62
    %vm65 = vcmask 261120
    %v67 = vsel %vm65, %v53, 0
    %69 = vmatprep.subr.mxu0 0.0
    %70 = vmatpush1.msra.mxu0 0.0
    %71 = vmatprep.subr.mxu0 0.0
    %72 = vmatpush1.msra.mxu0 0.0
    %73 = vmatprep.subr.mxu0 0.0
    %74 = vmatpush1.msra.mxu0 0.0
    %75 = vmatprep.subr.mxu0 0.0
    %76 = vmatpush1.msra.mxu0 0.0
    %77 = vmatprep.subr.mxu0 0.0
    %78 = vmatpush1.msra.mxu0 0.0
    %79 = vmatprep.subr.mxu0 0.0
    %80 = vmatpush1.msra.mxu0 0.0
    %81 = vmatprep.subr.mxu0 0.0
    %82 = vmatpush1.msra.mxu0 0.0
    %83 = vmatprep.subr.mxu0 0.0
    %84 = vmatpush1.msra.mxu0 0.0
    %85 = vmatprep.subr.mxu0 0.0
    %86 = vmatpush1.msra.mxu0 0.0
    %87 = vmatprep.subr.mxu0 0.0
    %88 = vmatpush1.msra.mxu0 0.0
    %89 = vmatprep.subr.mxu0 0.0
    %90 = vmatpush1.msra.mxu0 0.0
    %91 = vmatprep.subr.mxu0 0.0
    %92 = vmatpush1.msra.mxu0 0.0
    %93 = vmatprep.subr.mxu0 0.0
    %94 = vmatpush1.msra.mxu0 %v57
    %95 = vmatprep.subr.mxu0 0.0
    %96 = vmatpush1.msra.mxu0 %v56
    %97 = vmatprep.subr.mxu0 0.0
    %98 = vmatpush1.msra.mxu0 %v55
    %99 = vmatprep.subr.mxu0 0.0
    %100 = vmatpush1.msra.mxu0 %v54
    %101 = vmatprep.subr.mxu0 0.0
    %102 = vmatpush2.msra.mxu0 0.0
    %103 = vmatprep.subr.mxu0 0.0
    %104 = vmatpush2.msra.mxu0 0.0
    %105 = vmatprep.subr.mxu0 0.0
    %106 = vmatpush2.msra.mxu0 0.0
    %107 = vmatprep.subr.mxu0 0.0
    %108 = vmatpush2.msra.mxu0 0.0
    %109 = vmatprep.subr.mxu0 0.0
    %110 = vmatpush2.msra.mxu0 0.0
    %111 = vmatprep.subr.mxu0 0.0
    %112 = vmatpush2.msra.mxu0 0.0
    %113 = vmatprep.subr.mxu0 0.0
    %114 = vmatpush2.msra.mxu0 0.0
    %115 = vmatprep.subr.mxu0 0.0
    %116 = vmatpush2.msra.mxu0 0.0
    %117 = vmatprep.subr.mxu0 0.0
    %118 = vmatpush2.msra.mxu0 0.0
    %119 = vmatprep.subr.mxu0 0.0
    %120 = vmatpush2.msra.mxu0 0.0
    %121 = vmatprep.subr.mxu0 0.0
    %122 = vmatpush2.msra.mxu0 0.0
    %123 = vmatprep.subr.mxu0 0.0
    %124 = vmatpush2.msra.mxu0 0.0
    %125 = vmatprep.subr.mxu0 0.0
    %126 = vmatpush2.msra.mxu0 0.0
    %127 = vmatprep.subr.mxu0 0.0
    %128 = vmatpush2.msra.mxu0 0.0
    %129 = vmatprep.subr.mxu0 0.0
    %130 = vmatpush2.msra.mxu0 0.0
    %131 = vmatprep.subr.mxu0 0.0
    %132 = vmatpush2.msra.mxu0 0.0
    %133 = vmatprep.mubr.f32.mxu0 0.0
    %134 = vmatmul.mubr.f32.gmra.mxu0 %v67
    %v135 = vpop.f32.mrf.mxu0
    %v136 = vadd.f32 %v63, %v135
    %v137 = vpop.f32.mrf.mxu0
    %138 = vdwg.mxu0
    %vm139 = vcmp.ge.f32.partialorder %v136, 0.0
    %v140 = vmul.f32 %v136, 0.01
    %v141 = vsel %vm139, %v136, %v140
    %vm142 = vcmask 654336
    %v143 = vsel %vm142, %v141, 0.0
    %v144 = vrot.slane %v143, 4
    %v145 = vadd.f32 %v143, %v144
    %v146 = vrot.slane %v145, 2
    %v147 = vadd.f32 %v145, %v146
    %v148 = vrot.slane %v147, 1
    %v149 = vadd.f32 %v147, %v148
    %v150 = vrcp.pop 8.0
    %v151 = vmul.f32 %v149, %v150
    %v152 = vmul.f32 %v141, %v141
    %v153 = vsel %vm142, %v152, 0.0
    %v154 = vrot.slane %v153, 4
    %v155 = vadd.f32 %v153, %v154
    %v156 = vrot.slane %v155, 2
    %v157 = vadd.f32 %v155, %v156
    %v158 = vrot.slane %v157, 1
    %v159 = vadd.f32 %v157, %v158
    %v160 = vmul.f32 %v159, %v150
    %v161 = vmul.f32 %v151, %v151
    %v162 = vsub.f32 %v160, %v161
    %v163 = vmax.f32 %v162, 0.0
    %v164 = vadd.f32 %v163, 1e-05
    %v165 = vrsqrt.pop %v164
    %v166 = vsub.f32 %v141, %v151
    %v167 = vld [vmem:[%s3] sm:$0x1]
    %v168 = vmul.f32 %v165, %v167
    %v169 = vlaneseq
    %v170 = vshrl.u32 %v169, 7
    %v171 = vsub.s32 0, %v170
    %v172 = vrot.slane %v168, %v171
    %v173 = vmul.f32 %v166, %v172
    %v174 = vld [vmem:[%s4] sm:$0x1]
    %v176 = vlaneseq
    %v177 = vshrl.u32 %v176, 7
    %v178 = vsub.s32 0, %v177
    %v179 = vrot.slane %v174, %v178
    %v181 = vadd.f32 %v173, %v179
    %v182 = vld [vmem:[%s5] sm:$0xff]
    %v183 = vld [vmem:[%s5 + $0x8] sm:$0xff]
    %v184 = vld [vmem:[%s5 + $0x10] sm:$0xff]
    %v185 = vld [vmem:[%s5 + $0x18] sm:$0xff]
    %v186 = vld [vmem:[%s5 + $0x20] sm:$0xff]
    %v187 = vld [vmem:[%s5 + $0x28] sm:$0xff]
    %v188 = vld [vmem:[%s5 + $0x30] sm:$0xff]
    %v189 = vld [vmem:[%s5 + $0x38] sm:$0xff]
    %v190 = vld [vmem:[%s5 + $0x40] sm:$0xff]
    %v191 = vld [vmem:[%s5 + $0x48] sm:$0xff]
    %v192 = vld [vmem:[%s6] sm:$0x1]
    %v194 = vlaneseq
    %v195 = vshrl.u32 %v194, 7
    %v196 = vsub.s32 0, %v195
    %v197 = vrot.slane %v192, %v196
    %v200 = vsel %vm142, %v181, 0
    %202 = vmatprep.subr.mxu0 0.0
    %203 = vmatpush1.msra.mxu0 0.0
    %204 = vmatprep.subr.mxu0 0.0
    %205 = vmatpush1.msra.mxu0 0.0
    %206 = vmatprep.subr.mxu0 0.0
    %207 = vmatpush1.msra.mxu0 0.0
    %208 = vmatprep.subr.mxu0 0.0
    %209 = vmatpush1.msra.mxu0 0.0
    %210 = vmatprep.subr.mxu0 0.0
    %211 = vmatpush1.msra.mxu0 0.0
    %212 = vmatprep.subr.mxu0 0.0
    %213 = vmatpush1.msra.mxu0 0.0
    %214 = vmatprep.subr.mxu0 0.0
    %215 = vmatpush1.msra.mxu0 %v191
    %216 = vmatprep.subr.mxu0 0.0
    %217 = vmatpush1.msra.mxu0 %v190
    %218 = vmatprep.subr.mxu0 0.0
    %219 = vmatpush1.msra.mxu0 %v189
    %220 = vmatprep.subr.mxu0 0.0
    %221 = vmatpush1.msra.mxu0 %v188
    %222 = vmatprep.subr.mxu0 0.0
    %223 = vmatpush1.msra.mxu0 %v187
    %224 = vmatprep.subr.mxu0 0.0
    %225 = vmatpush1.msra.mxu0 %v186
    %226 = vmatprep.subr.mxu0 0.0
    %227 = vmatpush1.msra.mxu0 %v185
    %228 = vmatprep.subr.mxu0 0.0
    %229 = vmatpush1.msra.mxu0 %v184
    %230 = vmatprep.subr.mxu0 0.0
    %231 = vmatpush1.msra.mxu0 %v183
    %232 = vmatprep.subr.mxu0 0.0
    %233 = vmatpush1.msra.mxu0 %v182
    %234 = vmatprep.subr.mxu0 0.0
    %235 = vmatpush2.msra.mxu0 0.0
    %236 = vmatprep.subr.mxu0 0.0
    %237 = vmatpush2.msra.mxu0 0.0
    %238 = vmatprep.subr.mxu0 0.0
    %239 = vmatpush2.msra.mxu0 0.0
    %240 = vmatprep.subr.mxu0 0.0
    %241 = vmatpush2.msra.mxu0 0.0
    %242 = vmatprep.subr.mxu0 0.0
    %243 = vmatpush2.msra.mxu0 0.0
    %244 = vmatprep.subr.mxu0 0.0
    %245 = vmatpush2.msra.mxu0 0.0
    %246 = vmatprep.subr.mxu0 0.0
    %247 = vmatpush2.msra.mxu0 0.0
    %248 = vmatprep.subr.mxu0 0.0
    %249 = vmatpush2.msra.mxu0 0.0
    %250 = vmatprep.subr.mxu0 0.0
    %251 = vmatpush2.msra.mxu0 0.0
    %252 = vmatprep.subr.mxu0 0.0
    %253 = vmatpush2.msra.mxu0 0.0
    %254 = vmatprep.subr.mxu0 0.0
    %255 = vmatpush2.msra.mxu0 0.0
    %256 = vmatprep.subr.mxu0 0.0
    %257 = vmatpush2.msra.mxu0 0.0
    %258 = vmatprep.subr.mxu0 0.0
    %259 = vmatpush2.msra.mxu0 0.0
    %260 = vmatprep.subr.mxu0 0.0
    %261 = vmatpush2.msra.mxu0 0.0
    %262 = vmatprep.subr.mxu0 0.0
    %263 = vmatpush2.msra.mxu0 0.0
    %264 = vmatprep.subr.mxu0 0.0
    %265 = vmatpush2.msra.mxu0 0.0
    %266 = vmatprep.mubr.f32.mxu0 0.0
    %267 = vmatmul.mubr.f32.gmra.mxu0 %v200
    %v268 = vpop.f32.mrf.mxu0
    %v269 = vadd.f32 %v197, %v268
    %v270 = vpop.f32.mrf.mxu0
    %271 = vdwg.mxu0
    %vm272 = vcmp.ge.f32.partialorder %v269, 0.0
    %v273 = vmul.f32 %v269, 0.01
    %v274 = vsel %vm272, %v269, %v273
    %vm275 = vcmask 408576
    %v276 = vsel %vm275, %v274, 0.0
    %v277 = vrot.slane %v276, 4
    %v278 = vadd.f32 %v276, %v277
    %v279 = vrot.slane %v278, 2
    %v280 = vadd.f32 %v278, %v279
    %v281 = vrot.slane %v280, 1
    %v282 = vadd.f32 %v280, %v281
    %v283 = vmul.f32 %v282, %v150
    %v284 = vmul.f32 %v274, %v274
    %v285 = vsel %vm275, %v284, 0.0
    %v286 = vrot.slane %v285, 4
    %v287 = vadd.f32 %v285, %v286
    %v288 = vrot.slane %v287, 2
    %v289 = vadd.f32 %v287, %v288
    %v290 = vrot.slane %v289, 1
    %v291 = vadd.f32 %v289, %v290
    %v292 = vmul.f32 %v291, %v150
    %v293 = vmul.f32 %v283, %v283
    %v294 = vsub.f32 %v292, %v293
    %v295 = vmax.f32 %v294, 0.0
    %v296 = vadd.f32 %v295, 1e-05
    %v297 = vrsqrt.pop %v296
    %v298 = vsub.f32 %v274, %v283
    %v299 = vld [vmem:[%s7] sm:$0x1]
    %v300 = vmul.f32 %v297, %v299
    %v301 = vlaneseq
    %v302 = vshrl.u32 %v301, 7
    %v303 = vsub.s32 0, %v302
    %v304 = vrot.slane %v300, %v303
    %v305 = vmul.f32 %v298, %v304
    %v306 = vld [vmem:[%s8] sm:$0x1]
    %v308 = vlaneseq
    %v309 = vshrl.u32 %v308, 7
    %v310 = vsub.s32 0, %v309
    %v311 = vrot.slane %v306, %v310
    %v313 = vadd.f32 %v305, %v311
    %v314 = vld [vmem:[%s9] sm:$0xff]
    %v315 = vld [vmem:[%s9 + $0x8] sm:$0xff]
    %v316 = vld [vmem:[%s9 + $0x10] sm:$0xff]
    %v317 = vld [vmem:[%s9 + $0x18] sm:$0xff]
    %v318 = vld [vmem:[%s9 + $0x20] sm:$0xff]
    %v319 = vld [vmem:[%s9 + $0x28] sm:$0xff]
    %v320 = vld [vmem:[%s9 + $0x30] sm:$0x3]
    %v321 = vld [vmem:[%s10] sm:$0x1]
    %v323 = vlaneseq
    %v324 = vshrl.u32 %v323, 7
    %v325 = vsub.s32 0, %v324
    %v326 = vrot.slane %v321, %v325
    %v329 = vsel %vm275, %v313, 0
    %vm331 = vcmask 1041408
    %v333 = vsel %vm331, %v320, 0
    %335 = vmatprep.subr.mxu0 0.0
    %336 = vmatpush1.msra.mxu0 0.0
    %337 = vmatprep.subr.mxu0 0.0
    %338 = vmatpush1.msra.mxu0 0.0
    %339 = vmatprep.subr.mxu0 0.0
    %340 = vmatpush1.msra.mxu0 0.0
    %341 = vmatprep.subr.mxu0 0.0
    %342 = vmatpush1.msra.mxu0 0.0
    %343 = vmatprep.subr.mxu0 0.0
    %344 = vmatpush1.msra.mxu0 0.0
    %345 = vmatprep.subr.mxu0 0.0
    %346 = vmatpush1.msra.mxu0 0.0
    %347 = vmatprep.subr.mxu0 0.0
    %348 = vmatpush1.msra.mxu0 0.0
    %349 = vmatprep.subr.mxu0 0.0
    %350 = vmatpush1.msra.mxu0 0.0
    %351 = vmatprep.subr.mxu0 0.0
    %352 = vmatpush1.msra.mxu0 0.0
    %353 = vmatprep.subr.mxu0 0.0
    %354 = vmatpush1.msra.mxu0 %v333
    %355 = vmatprep.subr.mxu0 0.0
    %356 = vmatpush1.msra.mxu0 %v319
    %357 = vmatprep.subr.mxu0 0.0
    %358 = vmatpush1.msra.mxu0 %v318
    %359 = vmatprep.subr.mxu0 0.0
    %360 = vmatpush1.msra.mxu0 %v317
    %361 = vmatprep.subr.mxu0 0.0
    %362 = vmatpush1.msra.mxu0 %v316
    %363 = vmatprep.subr.mxu0 0.0
    %364 = vmatpush1.msra.mxu0 %v315
    %365 = vmatprep.subr.mxu0 0.0
    %366 = vmatpush1.msra.mxu0 %v314
    %367 = vmatprep.subr.mxu0 0.0
    %368 = vmatpush2.msra.mxu0 0.0
    %369 = vmatprep.subr.mxu0 0.0
    %370 = vmatpush2.msra.mxu0 0.0
    %371 = vmatprep.subr.mxu0 0.0
    %372 = vmatpush2.msra.mxu0 0.0
    %373 = vmatprep.subr.mxu0 0.0
    %374 = vmatpush2.msra.mxu0 0.0
    %375 = vmatprep.subr.mxu0 0.0
    %376 = vmatpush2.msra.mxu0 0.0
    %377 = vmatprep.subr.mxu0 0.0
    %378 = vmatpush2.msra.mxu0 0.0
    %379 = vmatprep.subr.mxu0 0.0
    %380 = vmatpush2.msra.mxu0 0.0
    %381 = vmatprep.subr.mxu0 0.0
    %382 = vmatpush2.msra.mxu0 0.0
    %383 = vmatprep.subr.mxu0 0.0
    %384 = vmatpush2.msra.mxu0 0.0
    %385 = vmatprep.subr.mxu0 0.0
    %386 = vmatpush2.msra.mxu0 0.0
    %387 = vmatprep.subr.mxu0 0.0
    %388 = vmatpush2.msra.mxu0 0.0
    %389 = vmatprep.subr.mxu0 0.0
    %390 = vmatpush2.msra.mxu0 0.0
    %391 = vmatprep.subr.mxu0 0.0
    %392 = vmatpush2.msra.mxu0 0.0
    %393 = vmatprep.subr.mxu0 0.0
    %394 = vmatpush2.msra.mxu0 0.0
    %395 = vmatprep.subr.mxu0 0.0
    %396 = vmatpush2.msra.mxu0 0.0
    %397 = vmatprep.subr.mxu0 0.0
    %398 = vmatpush2.msra.mxu0 0.0
    %399 = vmatprep.mubr.f32.mxu0 0.0
    %400 = vmatmul.mubr.f32.gmra.mxu0 %v329
    %v401 = vpop.f32.mrf.mxu0
    %v402 = vadd.f32 %v326, %v401
    %v403 = vpop.f32.mrf.mxu0
    %404 = vdwg.mxu0
    %vm405 = vcmp.ge.f32.partialorder %v402, 0.0
    %v406 = vmul.f32 %v402, 0.01
    %v407 = vsel %vm405, %v402, %v406
    %vm408 = vcmask 244736
    %v409 = vsel %vm408, %v407, 0.0
    %v410 = vrot.slane %v409, 4
    %v411 = vadd.f32 %v409, %v410
    %v412 = vrot.slane %v411, 2
    %v413 = vadd.f32 %v411, %v412
    %v414 = vrot.slane %v413, 1
    %v415 = vadd.f32 %v413, %v414
    %v416 = vmul.f32 %v415, %v150
    %v417 = vmul.f32 %v407, %v407
    %v418 = vsel %vm408, %v417, 0.0
    %v419 = vrot.slane %v418, 4
    %v420 = vadd.f32 %v418, %v419
    %v421 = vrot.slane %v420, 2
    %v422 = vadd.f32 %v420, %v421
    %v423 = vrot.slane %v422, 1
    %v424 = vadd.f32 %v422, %v423
    %v425 = vmul.f32 %v424, %v150
    %v426 = vmul.f32 %v416, %v416
    %v427 = vsub.f32 %v425, %v426
    %v428 = vmax.f32 %v427, 0.0
    %v429 = vadd.f32 %v428, 1e-05
    %v430 = vrsqrt.pop %v429
    %v431 = vsub.f32 %v407, %v416
    %v432 = vld [vmem:[%s11] sm:$0x1]
    %v433 = vmul.f32 %v430, %v432
    %v434 = vlaneseq
    %v435 = vshrl.u32 %v434, 7
    %v436 = vsub.s32 0, %v435
    %v437 = vrot.slane %v433, %v436
    %v438 = vmul.f32 %v431, %v437
    %v439 = vld [vmem:[%s12] sm:$0x1]
    %v441 = vlaneseq
    %v442 = vshrl.u32 %v441, 7
    %v443 = vsub.s32 0, %v442
    %v444 = vrot.slane %v439, %v443
    %v446 = vadd.f32 %v438, %v444
    %v447 = vld [vmem:[%s13] sm:$0x1]
    %v448 = vld [vmem:[#allocation2] sm:$0x1]
    %450 = vset.pattern.permute.xlu0 0
    %451 = vperm.xlu0 %450, %v448
    %v452 = vpop.permute.xlu0 %451
    %v454 = vlaneseq
    %v455 = vshrl.u32 %v454, 7
    %v456 = vsub.s32 0, %v455
    %v457 = vrot.slane %v452, %v456
    %v459 = vsel %vm408, %v447, 0
    %v462 = vsel %vm408, %v446, 0
    %464 = vmatprep.subr.mxu0 0.0
    %465 = vmatpush1.xpose.msra.mxu0 0.0
    %466 = vmatprep.subr.mxu0 0.0
    %467 = vmatpush1.xpose.msra.mxu0 0.0
    %468 = vmatprep.subr.mxu0 0.0
    %469 = vmatpush1.xpose.msra.mxu0 0.0
    %470 = vmatprep.subr.mxu0 0.0
    %471 = vmatpush1.xpose.msra.mxu0 0.0
    %472 = vmatprep.subr.mxu0 0.0
    %473 = vmatpush1.xpose.msra.mxu0 0.0
    %474 = vmatprep.subr.mxu0 0.0
    %475 = vmatpush1.xpose.msra.mxu0 0.0
    %476 = vmatprep.subr.mxu0 0.0
    %477 = vmatpush1.xpose.msra.mxu0 0.0
    %478 = vmatprep.subr.mxu0 0.0
    %479 = vmatpush1.xpose.msra.mxu0 0.0
    %480 = vmatprep.subr.mxu0 0.0
    %481 = vmatpush1.xpose.msra.mxu0 0.0
    %482 = vmatprep.subr.mxu0 0.0
    %483 = vmatpush1.xpose.msra.mxu0 0.0
    %484 = vmatprep.subr.mxu0 0.0
    %485 = vmatpush1.xpose.msra.mxu0 0.0
    %486 = vmatprep.subr.mxu0 0.0
    %487 = vmatpush1.xpose.msra.mxu0 0.0
    %488 = vmatprep.subr.mxu0 0.0
    %489 = vmatpush1.xpose.msra.mxu0 0.0
    %490 = vmatprep.subr.mxu0 0.0
    %491 = vmatpush1.xpose.msra.mxu0 0.0
    %492 = vmatprep.subr.mxu0 0.0
    %493 = vmatpush1.xpose.msra.mxu0 0.0
    %494 = vmatprep.subr.mxu0 0.0
    %495 = vmatpush1.xpose.msra.mxu0 %v462
    %496 = vmatprep.subr.mxu0 0.0
    %497 = vmatpush2.xpose.msra.mxu0 0.0
    %498 = vmatprep.subr.mxu0 0.0
    %499 = vmatpush2.xpose.msra.mxu0 0.0
    %500 = vmatprep.subr.mxu0 0.0
    %501 = vmatpush2.xpose.msra.mxu0 0.0
    %502 = vmatprep.subr.mxu0 0.0
    %503 = vmatpush2.xpose.msra.mxu0 0.0
    %504 = vmatprep.subr.mxu0 0.0
    %505 = vmatpush2.xpose.msra.mxu0 0.0
    %506 = vmatprep.subr.mxu0 0.0
    %507 = vmatpush2.xpose.msra.mxu0 0.0
    %508 = vmatprep.subr.mxu0 0.0
    %509 = vmatpush2.xpose.msra.mxu0 0.0
    %510 = vmatprep.subr.mxu0 0.0
    %511 = vmatpush2.xpose.msra.mxu0 0.0
    %512 = vmatprep.subr.mxu0 0.0
    %513 = vmatpush2.xpose.msra.mxu0 0.0
    %514 = vmatprep.subr.mxu0 0.0
    %515 = vmatpush2.xpose.msra.mxu0 0.0
    %516 = vmatprep.subr.mxu0 0.0
    %517 = vmatpush2.xpose.msra.mxu0 0.0
    %518 = vmatprep.subr.mxu0 0.0
    %519 = vmatpush2.xpose.msra.mxu0 0.0
    %520 = vmatprep.subr.mxu0 0.0
    %521 = vmatpush2.xpose.msra.mxu0 0.0
    %522 = vmatprep.subr.mxu0 0.0
    %523 = vmatpush2.xpose.msra.mxu0 0.0
    %524 = vmatprep.subr.mxu0 0.0
    %525 = vmatpush2.xpose.msra.mxu0 0.0
    %526 = vmatprep.subr.mxu0 0.0
    %527 = vmatpush2.xpose.msra.mxu0 0.0
    %528 = vmatprep.mubr.f32.mxu0 0.0
    %529 = vmatmul.mubr.f32.gmra.mxu0 %v459
    %v530 = vpop.f32.mrf.mxu0
    %v531 = vadd.f32 %v457, %v530
    %v532 = vpop.f32.mrf.mxu0
    %533 = vdwg.mxu0
    %v534 = vsub.f32 0.0, %v531
    %v535 = vmul.f32 %v534, 1.442695
    %v536 = vpow.pop %v535
    %v537 = vadd.f32 %v536, 1.0
    %v538 = vrcp.pop %v537
    %v539 = vmul.f32 1.0, %v538
    %vm540 = vcmask 57344
    %541 = vst.msk [vmem:[#allocation3] sm:$0x1] %vm540, %v539
    // Predicated region
    $region62: #{classifier_binary_forward.1} parent=1 // pred_check
      _
    $region63: #{classifier_binary_forward.1} parent=1 // pred_check_branch
      %543 = sbr.rel (0) target = $region65
    $region64: #{classifier_binary_forward.1} parent=1 // pred_region
      %s545 = ssub.s32 16, 16
      %546 = vsyncadd [#allocation4], %s545
      %s548 = sshll.u32 [#allocation3], 4
      %s549 = int_to_ptr.vmem [resolvable:$true] %s548
      %551 = dma.vmem_to_hbm [thread:$0]  %s549, 16, %s15, [#allocation4]
    $region65: #{classifier_binary_forward.1} parent=1 // pred_fallthru
      _
    // Predicated region
    $region66: #{classifier_binary_forward.1} parent=1 // pred_check
      _
    $region67: #{classifier_binary_forward.1} parent=1 // pred_check_branch
      %553 = sbr.rel (0) target = $region69
    $region68: #{classifier_binary_forward.1} parent=1 // pred_region
      %554 = dma.done [#allocation4], 16
    $region69: #{classifier_binary_forward.1} parent=1 // pred_fallthru
      _
    %555 = vsyncpa [#allocation4], 1

</llo_original>
